<compile_context>
chip_gen: v7x
topology: tpu7x:2x2x1
jax: 0.10.0
libtpu: 0.0.40
codegen_flags: <defaults>
</compile_context>

<pallas_src>
import functools
import math

import jax
import jax.numpy as jnp
from jax.experimental import pallas as pl
from jax.experimental.pallas import tpu as pltpu


# ----------------------------- Pallas kernel --------------------------------
def _gcn_net_kernel(offs, a_ref, x_ref, p_ref, o_ref):
    """Fused 3-layer GCN + flatten + Linear(..., 1) + sigmoid.

    offs  : name -> (row_offset, n_rows, n_cols) static slices into the slab
    a_ref : (N, N)      normalized adjacency A_hat (shared across the batch)
    x_ref : (N, B*Cin)  batch-fused node features
    p_ref : (R, 128)    packed parameter slab (block-diag weights, biases, ...)
    o_ref : (1, B)      sigmoid(logits), one per batch element
    """
    def take(name):
        r, nr, nc = offs[name]
        return p_ref[r:r + nr, 0:nc]

    A = a_ref[...]
    h = x_ref[...]

    # three GCN layers: relu(A_hat @ (H @ W_blk) + b), all batches at once
    for wname, bname in (("w1", "b1"), ("w2", "b2"), ("w3", "b3")):
        xw = jnp.dot(h, take(wname), preferred_element_type=jnp.float32)  # (N, B*Cout)
        ax = jnp.dot(A, xw, preferred_element_type=jnp.float32)           # aggregate
        h = jnp.maximum(ax + take(bname), 0.0)                            # bias + ReLU

    # lin1 on row-major flattened (node, channel) + sigmoid, vectorized over B:
    #   logit_b = sum_{n,c} h_b[n,c] * wl[n,c] + bl
    p = h * take("wl")                                     # (N, B*Cout)
    col = jnp.sum(p, axis=0, keepdims=True)                # (1, B*Cout)
    logits = jnp.dot(col, take("sel"),
                     preferred_element_type=jnp.float32) + take("bl")     # (1, B)
    o_ref[...] = pl.reciprocal(1.0 + jnp.exp(-logits), approx=True)       # sigmoid


# ------------------------------- wrapper -------------------------------------
def gcn_net_forward(x, A, params):
    """x: (B, N, Cin) node features, A: (N, N) normalized adjacency."""
    B, N, c_in = x.shape
    (w1, b1), (w2, b2), (w3, b3), (wl, bl) = params
    c_out = w3.shape[1]

    # ---- layout plumbing (wrapper side, free; kernel stays reshape-free) ----
    # features: (B, N, Cin) -> (N, B*Cin)  with column index b*Cin + c
    x_packed = jnp.transpose(x, (1, 0, 2)).reshape(N, B * c_in).astype(jnp.float32)

    eye_b = jnp.eye(B, dtype=jnp.float32)
    pieces = {
        # block-diagonal weights so the per-batch X @ W is one matmul
        "w1": jnp.kron(eye_b, w1),                        # (B*Cin, B*32)
        "w2": jnp.kron(eye_b, w2),                        # (B*32,  B*64)
        "w3": jnp.kron(eye_b, w3),                        # (B*64,  B*Cout)
        # lin1 weight in torch flatten order (N, Cout), tiled across the batch
        "wl": jnp.tile(wl.reshape(N, c_out), (1, B)),     # (N, B*Cout)
        # per-batch column-block selector for the final reduce
        "sel": jnp.repeat(eye_b, c_out, axis=0),          # (B*Cout, B)
        "b1": jnp.tile(b1, (1, B)),
        "b2": jnp.tile(b2, (1, B)),
        "b3": jnp.tile(b3, (1, B)),
        "bl": bl,
    }

    # ---- pack everything into one lane-dense f32 slab (single DMA) ----
    LANES = 128
    offs, rows, cur = {}, [], 0
    for name, a in pieces.items():
        a = a.astype(jnp.float32)
        assert a.shape[1] <= LANES, (name, a.shape)
        offs[name] = (cur, a.shape[0], a.shape[1])
        a = jnp.pad(a, ((0, (-a.shape[0]) % 8), (0, LANES - a.shape[1])))
        rows.append(a)
        cur += a.shape[0]
    slab = jnp.concatenate(rows, axis=0)                  # (R, 128), ~150 KB

    vmem = pl.BlockSpec(memory_space=pltpu.MemorySpace.VMEM)
    out = pl.pallas_call(
        functools.partial(_gcn_net_kernel, offs),
        out_shape=jax.ShapeDtypeStruct((1, B), jnp.float32),
        in_specs=[vmem, vmem, vmem],   # 3 DMAs: A, packed features, param slab
        out_specs=vmem,
    )(A, x_packed, slab)
    return out.reshape(B, 1)


# ----------------------------- glue (plain JAX) ------------------------------
def normalized_adjacency(edge_index, num_nodes):
    """GCNConv.norm: add self-loops, symmetric D^-1/2 (A+I) D^-1/2 (dense)."""
    # TODO(synk): assumes the input edge_index has no pre-existing self loops
    # (matches add_remaining_self_loops in that case).
    src, dst = edge_index[0], edge_index[1]
    loop = jnp.arange(num_nodes, dtype=edge_index.dtype)
    src = jnp.concatenate([src, loop])
    dst = jnp.concatenate([dst, loop])
    ew = jnp.ones(src.shape, jnp.float32)
    deg = jnp.zeros((num_nodes,), jnp.float32).at[src].add(ew)
    dis = jnp.where(deg > 0, jax.lax.rsqrt(deg), 0.0)
    norm = dis[src] * ew * dis[dst]
    # out[i] = sum over edges (j->i) norm * x[j]   =>   A[dst, src] += norm
    return jnp.zeros((num_nodes, num_nodes), jnp.float32).at[dst, src].add(norm)


def glorot(key, shape):
    stdv = math.sqrt(6.0 / (shape[-2] + shape[-1]))
    return jax.random.uniform(key, shape, jnp.float32, -stdv, stdv)


# --------------------------------- main --------------------------------------
if __name__ == "__main__":
    B, N, C_IN, C_OUT = 2, 16, 8, 16   # batch, node_num, in_channel, out_channel
    key = jax.random.PRNGKey(0)
    ks = jax.random.split(key, 6)

    # node features (B, N, C_in)
    x = jax.random.normal(ks[0], (B, N, C_IN), jnp.float32)

    # deterministic bidirectional ring graph, no self loops, shape (2, E)
    idx = jnp.arange(N, dtype=jnp.int32)
    edge_index = jnp.stack([
        jnp.concatenate([idx, (idx + 1) % N]),
        jnp.concatenate([(idx + 1) % N, idx]),
    ])

    A = normalized_adjacency(edge_index, N)

    # parameters (glorot weights, zero biases, as in GCNConv.reset_parameters)
    w1 = glorot(ks[1], (C_IN, 32)); b1 = jnp.zeros((1, 32), jnp.float32)
    w2 = glorot(ks[2], (32, 64));   b2 = jnp.zeros((1, 64), jnp.float32)
    w3 = glorot(ks[3], (64, C_OUT)); b3 = jnp.zeros((1, C_OUT), jnp.float32)
    bound = 1.0 / math.sqrt(C_OUT * N)
    wl = jax.random.uniform(ks[4], (1, C_OUT * N), jnp.float32, -bound, bound)
    bl = jax.random.uniform(ks[5], (1, 1), jnp.float32, -bound, bound)
    params = ((w1, b1), (w2, b2), (w3, b3), (wl, bl))

    out = gcn_net_forward(x, A, params)
    out = jax.block_until_ready(out)

    # pure-JAX reference for sanity
    def ref(xi):
        h = xi
        for w, b in ((w1, b1), (w2, b2), (w3, b3)):
            h = jnp.maximum(jnp.einsum("ij,bjc->bic", A, h @ w) + b, 0.0)
        flat = h.reshape(B, -1)
        return jax.nn.sigmoid(flat @ wl.T + bl)

    r = jax.block_until_ready(ref(x))
    assert out.shape == (B, 1), out.shape
    assert bool(jnp.all(jnp.isfinite(out)))
    assert bool(jnp.allclose(out, r, atol=1e-2, rtol=1e-2)), (out, r)
    print("KERNEL_OK")
</pallas_src>

<mosaic_0001>
module attributes {stable_mosaic.version = 11 : i64} {
  func.func @_gcn_net_kernel(%arg0: memref<16x16xf32, #tpu.memory_space<vmem>>, %arg1: memref<16x16xf32, #tpu.memory_space<vmem>>, %arg2: memref<288x128xf32, #tpu.memory_space<vmem>>, %arg3: memref<1x2xf32, #tpu.memory_space<vmem>>) attributes {dimension_semantics = [], scalar_prefetch = 0 : i64, scratch_operands = 0 : i64, tpu.core_type = #tpu.core_type<tc>} {
    %c0 = arith.constant 0 : index
    %c0_0 = arith.constant 0 : index
    %0 = vector.load %arg0[%c0, %c0_0] : memref<16x16xf32, #tpu.memory_space<vmem>>, vector<16x16xf32>
    %c0_1 = arith.constant 0 : index
    %c0_2 = arith.constant 0 : index
    %1 = vector.load %arg1[%c0_1, %c0_2] : memref<16x16xf32, #tpu.memory_space<vmem>>, vector<16x16xf32>
    %c0_3 = arith.constant 0 : index
    %c0_4 = arith.constant 0 : index
    %2 = vector.load %arg2[%c0_3, %c0_4] : memref<288x128xf32, #tpu.memory_space<vmem>>, vector<16x64xf32>
    %cst = arith.constant dense<0.000000e+00> : vector<16x64xf32>
    %3 = tpu.matmul %1, %2, %cst {dimension_numbers = #tpu.dot_dimension_numbers<[1], [0], [0], [1], [0, 0, 1, 1], [], []>} : vector<16x16xf32>, vector<16x64xf32>, vector<16x64xf32> -> vector<16x64xf32>
    %cst_5 = arith.constant dense<0.000000e+00> : vector<16x64xf32>
    %4 = tpu.matmul %0, %3, %cst_5 {dimension_numbers = #tpu.dot_dimension_numbers<[1], [0], [0], [1], [0, 0, 1, 1], [], []>} : vector<16x16xf32>, vector<16x64xf32>, vector<16x64xf32> -> vector<16x64xf32>
    %c256 = arith.constant 256 : index
    %c0_6 = arith.constant 0 : index
    %5 = vector.load %arg2[%c256, %c0_6] : memref<288x128xf32, #tpu.memory_space<vmem>>, vector<1x64xf32>
    %6 = vector.broadcast %5 : vector<1x64xf32> to vector<16x64xf32>
    %7 = arith.addf %4, %6 : vector<16x64xf32>
    %cst_7 = arith.constant 0.000000e+00 : f32
    %8 = vector.broadcast %cst_7 : f32 to vector<16x64xf32>
    %9 = arith.maximumf %7, %8 : vector<16x64xf32>
    %c16 = arith.constant 16 : index
    %c0_8 = arith.constant 0 : index
    %10 = vector.load %arg2[%c16, %c0_8] : memref<288x128xf32, #tpu.memory_space<vmem>>, vector<64x128xf32>
    %cst_9 = arith.constant dense<0.000000e+00> : vector<16x128xf32>
    %11 = tpu.matmul %9, %10, %cst_9 {dimension_numbers = #tpu.dot_dimension_numbers<[1], [0], [0], [1], [0, 0, 1, 1], [], []>} : vector<16x64xf32>, vector<64x128xf32>, vector<16x128xf32> -> vector<16x128xf32>
    %cst_10 = arith.constant dense<0.000000e+00> : vector<16x128xf32>
    %12 = tpu.matmul %0, %11, %cst_10 {dimension_numbers = #tpu.dot_dimension_numbers<[1], [0], [0], [1], [0, 0, 1, 1], [], []>} : vector<16x16xf32>, vector<16x128xf32>, vector<16x128xf32> -> vector<16x128xf32>
    %c264 = arith.constant 264 : index
    %c0_11 = arith.constant 0 : index
    %13 = vector.load %arg2[%c264, %c0_11] : memref<288x128xf32, #tpu.memory_space<vmem>>, vector<1x128xf32>
    %14 = vector.broadcast %13 : vector<1x128xf32> to vector<16x128xf32>
    %15 = arith.addf %12, %14 : vector<16x128xf32>
    %cst_12 = arith.constant 0.000000e+00 : f32
    %16 = vector.broadcast %cst_12 : f32 to vector<16x128xf32>
    %17 = arith.maximumf %15, %16 : vector<16x128xf32>
    %c80 = arith.constant 80 : index
    %c0_13 = arith.constant 0 : index
    %18 = vector.load %arg2[%c80, %c0_13] : memref<288x128xf32, #tpu.memory_space<vmem>>, vector<128x32xf32>
    %cst_14 = arith.constant dense<0.000000e+00> : vector<16x32xf32>
    %19 = tpu.matmul %17, %18, %cst_14 {dimension_numbers = #tpu.dot_dimension_numbers<[1], [0], [0], [1], [0, 0, 1, 1], [], []>} : vector<16x128xf32>, vector<128x32xf32>, vector<16x32xf32> -> vector<16x32xf32>
    %cst_15 = arith.constant dense<0.000000e+00> : vector<16x32xf32>
    %20 = tpu.matmul %0, %19, %cst_15 {dimension_numbers = #tpu.dot_dimension_numbers<[1], [0], [0], [1], [0, 0, 1, 1], [], []>} : vector<16x16xf32>, vector<16x32xf32>, vector<16x32xf32> -> vector<16x32xf32>
    %c272 = arith.constant 272 : index
    %c0_16 = arith.constant 0 : index
    %21 = vector.load %arg2[%c272, %c0_16] : memref<288x128xf32, #tpu.memory_space<vmem>>, vector<1x32xf32>
    %22 = vector.broadcast %21 : vector<1x32xf32> to vector<16x32xf32>
    %23 = arith.addf %20, %22 : vector<16x32xf32>
    %cst_17 = arith.constant 0.000000e+00 : f32
    %24 = vector.broadcast %cst_17 : f32 to vector<16x32xf32>
    %25 = arith.maximumf %23, %24 : vector<16x32xf32>
    %c208 = arith.constant 208 : index
    %c0_18 = arith.constant 0 : index
    %26 = vector.load %arg2[%c208, %c0_18] : memref<288x128xf32, #tpu.memory_space<vmem>>, vector<16x32xf32>
    %27 = arith.mulf %25, %26 : vector<16x32xf32>
    %cst_19 = arith.constant dense<0.000000e+00> : vector<32xf32>
    %28 = vector.multi_reduction <add>, %27, %cst_19 [0] : vector<16x32xf32> to vector<32xf32>
    %29 = vector.shape_cast %28 : vector<32xf32> to vector<1x32xf32>
    %c224 = arith.constant 224 : index
    %c0_20 = arith.constant 0 : index
    %30 = vector.load %arg2[%c224, %c0_20] : memref<288x128xf32, #tpu.memory_space<vmem>>, vector<32x2xf32>
    %cst_21 = arith.constant dense<0.000000e+00> : vector<1x2xf32>
    %31 = tpu.matmul %29, %30, %cst_21 {dimension_numbers = #tpu.dot_dimension_numbers<[1], [0], [0], [1], [0, 0, 1, 1], [], []>} : vector<1x32xf32>, vector<32x2xf32>, vector<1x2xf32> -> vector<1x2xf32>
    %c280 = arith.constant 280 : index
    %c0_22 = arith.constant 0 : index
    %32 = vector.load %arg2[%c280, %c0_22] : memref<288x128xf32, #tpu.memory_space<vmem>>, vector<1x1xf32>
    %33 = vector.broadcast %32 : vector<1x1xf32> to vector<1x2xf32>
    %34 = arith.addf %31, %33 : vector<1x2xf32>
    %cst_23 = arith.constant 0.000000e+00 : f32
    %35 = vector.broadcast %cst_23 : f32 to vector<1x2xf32>
    %36 = arith.subf %35, %34 : vector<1x2xf32>
    %37 = math.exp %36 : vector<1x2xf32>
    %cst_24 = arith.constant 1.000000e+00 : f32
    %38 = vector.broadcast %cst_24 : f32 to vector<1x2xf32>
    %39 = arith.addf %38, %37 : vector<1x2xf32>
    %40 = tpu.reciprocal %39 {approx = true} : vector<1x2xf32> -> vector<1x2xf32>
    %c0_25 = arith.constant 0 : index
    %c0_26 = arith.constant 0 : index
    %41 = vector.load %arg3[%c0_25, %c0_26] : memref<1x2xf32, #tpu.memory_space<vmem>>, vector<1x2xf32>
    tpu.vector_store %arg3[%c0_25, %c0_26], %40 {strides = array<i32>} : memref<1x2xf32, #tpu.memory_space<vmem>>, vector<1x2xf32>,
    return
  }
}

</mosaic_0001>

<llo_original>
// kernel: tpu_custom_call.1
$region0: #{tpu_custom_call.1}
  #allocation0 [shape = 'u32[]', space=smem, size = 0x4, offset = 0x4, fixed_abs, tag = 'smem constant byte address 0x4 - core index']
  #allocation1 [shape = 'u32[144,128]{1,0:T(1,128)}', space=vmem, size = 0x12000, scoped, tag = 'internal scratch']
  %s0 = inlined_call_operand.hbm [shape: f32[16,16], index: 0, kind: input, shape index: {}]
  %s1 = inlined_call_operand.hbm [shape: f32[16,16], index: 1, kind: input, shape index: {}]
  %s2 = inlined_call_operand.hbm [shape: f32[288,128], index: 2, kind: input, shape index: {}]
  %s3 = inlined_call_operand.hbm [shape: f32[1,2], index: 3, kind: output, shape index: {}]
  %s4 = sld [smem:[#allocation0]]
  $region34: #{tpu_custom_call.1} parent=0
    _
  %s6 = ssub.s32 1, %s4
  %s7 = scalar_select 0, %s6, %s4
  $region1: #{tpu_custom_call.1} parent=0
    #allocation2 [shape = 'u8[8192]{0}', space=vmem, size = 0x2000, scoped, tag = 'input window, operand 0, single buffered']
    #allocation3 [shape = 's32[1]{0}', space=sflag, size = 0x4, scoped, tag = 'scoped memory for tpu_custom_call.1']
    #allocation4 [shape = 's32[1]{0}', space=sflag, size = 0x4, scoped, tag = 'scoped memory for tpu_custom_call.1']
    #allocation5 [shape = 'u8[8192]{0}', space=vmem, size = 0x2000, scoped, tag = 'input window, operand 1, single buffered']
    #allocation6 [shape = 's32[1]{0}', space=sflag, size = 0x4, scoped, tag = 'scoped memory for tpu_custom_call.1']
    #allocation7 [shape = 'u8[147456]{0}', space=vmem, size = 0x24000, scoped, tag = 'input window, operand 2, single buffered']
    #allocation8 [shape = 'u8[512]{0}', space=vmem, size = 0x400, scoped, tag = 'output window, operand 0, single buffered']
    %8 = vsyncpa [#allocation3], 0
    %9 = vsyncpa [#allocation6], 0
    %10 = vsyncpa [#allocation4], 0
    // Predicated region
    $region2: #{tpu_custom_call.1} parent=1 // pred_check
      _
    $region3: #{tpu_custom_call.1} parent=1 // pred_check_branch
      %12 = sbr.rel (0) target = $region5
    $region4: #{tpu_custom_call.1} parent=1 // pred_region
      %s14 = ssub.s32 256, 256
      %15 = vsyncadd [#allocation3], %s14
      %s16 = sshll.u32 [#allocation2], 4
      %s17 = int_to_ptr.vmem [resolvable:$true] %s16
      %22 = dma.hbm_to_vmem [thread:$0]  %s0, 256, %s17, [#allocation3], 128, 128, 8
    $region5: #{tpu_custom_call.1} parent=1 // pred_fallthru
      _
    // Predicated region
    $region6: #{tpu_custom_call.1} parent=1 // pred_check
      _
    $region7: #{tpu_custom_call.1} parent=1 // pred_check_branch
      %24 = sbr.rel (0) target = $region9
    $region8: #{tpu_custom_call.1} parent=1 // pred_region
      %s26 = ssub.s32 256, 256
      %27 = vsyncadd [#allocation6], %s26
      %s28 = sshll.u32 [#allocation5], 4
      %s29 = int_to_ptr.vmem [resolvable:$true] %s28
      %34 = dma.hbm_to_vmem [thread:$0]  %s1, 256, %s29, [#allocation6], 128, 128, 8
    $region9: #{tpu_custom_call.1} parent=1 // pred_fallthru
      _
    // Predicated region
    $region10: #{tpu_custom_call.1} parent=1 // pred_check
      _
    $region11: #{tpu_custom_call.1} parent=1 // pred_check_branch
      %36 = sbr.rel (0) target = $region13
    $region12: #{tpu_custom_call.1} parent=1 // pred_region
      %s38 = ssub.s32 4608, 4608
      %39 = vsyncadd [#allocation6], %s38
      %s40 = sshll.u32 [#allocation7], 4
      %s41 = int_to_ptr.vmem [resolvable:$true] %s40
      %46 = dma.hbm_to_vmem [thread:$0]  %s2, 4608, %s41, [#allocation6], 128, 128, 8
    $region13: #{tpu_custom_call.1} parent=1 // pred_fallthru
      _
    // Predicated region
    $region14: #{tpu_custom_call.1} parent=1 // pred_check
      _
    $region15: #{tpu_custom_call.1} parent=1 // pred_check_branch
      %48 = sbr.rel (0) target = $region17
    $region16: #{tpu_custom_call.1} parent=1 // pred_region
      %49 = dma.done [#allocation3], 256
    $region17: #{tpu_custom_call.1} parent=1 // pred_fallthru
      _
    // Predicated region
    $region18: #{tpu_custom_call.1} parent=1 // pred_check
      _
    $region19: #{tpu_custom_call.1} parent=1 // pred_check_branch
      %51 = sbr.rel (0) target = $region21
    $region20: #{tpu_custom_call.1} parent=1 // pred_region
      %52 = dma.done [#allocation6], 256
    $region21: #{tpu_custom_call.1} parent=1 // pred_fallthru
      _
    // Predicated region
    $region22: #{tpu_custom_call.1} parent=1 // pred_check
      _
    $region23: #{tpu_custom_call.1} parent=1 // pred_check_branch
      %54 = sbr.rel (0) target = $region25
    $region24: #{tpu_custom_call.1} parent=1 // pred_region
      %55 = dma.done [#allocation6], 4608
    $region25: #{tpu_custom_call.1} parent=1 // pred_fallthru
      _
    %v56 = vld [vmem:[#allocation2] sm:$0xff]
    %v57 = vld [vmem:[#allocation2 + $0x8] sm:$0xff]
    %v58 = vld [vmem:[#allocation5] sm:$0xff]
    %v59 = vld [vmem:[#allocation5 + $0x8] sm:$0xff]
    %v60 = vld [vmem:[#allocation7] sm:$0xff]
    %v61 = vld [vmem:[#allocation7 + $0x8] sm:$0xff]
    %vm62 = vcmask 130048
    %v64 = vsel %vm62, %v58, 0
    %v67 = vsel %vm62, %v59, 0
    %69 = vmatprep.subr.mxu0 0.0
    %70 = vmatpush1.msra.mxu0 %v60
    %71 = vmatprep.subr.mxu0 0.0
    %72 = vmatpush1.msra.mxu0 %v61
    %73 = vmatprep.subr.mxu0 0.0
    %74 = vmatpush1.msra.mxu0 0.0
    %75 = vmatprep.subr.mxu0 0.0
    %76 = vmatpush1.msra.mxu0 0.0
    %77 = vmatprep.subr.mxu0 0.0
    %78 = vmatpush1.msra.mxu0 0.0
    %79 = vmatprep.subr.mxu0 0.0
    %80 = vmatpush1.msra.mxu0 0.0
    %81 = vmatprep.subr.mxu0 0.0
    %82 = vmatpush1.msra.mxu0 0.0
    %83 = vmatprep.subr.mxu0 0.0
    %84 = vmatpush1.msra.mxu0 0.0
    %85 = vmatprep.subr.mxu0 0.0
    %86 = vmatpush1.msra.mxu0 0.0
    %87 = vmatprep.subr.mxu0 0.0
    %88 = vmatpush1.msra.mxu0 0.0
    %89 = vmatprep.subr.mxu0 0.0
    %90 = vmatpush1.msra.mxu0 0.0
    %91 = vmatprep.subr.mxu0 0.0
    %92 = vmatpush1.msra.mxu0 0.0
    %93 = vmatprep.subr.mxu0 0.0
    %94 = vmatpush1.msra.mxu0 0.0
    %95 = vmatprep.subr.mxu0 0.0
    %96 = vmatpush1.msra.mxu0 0.0
    %97 = vmatprep.subr.mxu0 0.0
    %98 = vmatpush1.msra.mxu0 0.0
    %99 = vmatprep.subr.mxu0 0.0
    %100 = vmatpush1.msra.mxu0 0.0
    %101 = vmatprep.subr.mxu0 0.0
    %102 = vmatpush1.msra.mxu0 0.0
    %103 = vmatprep.subr.mxu0 0.0
    %104 = vmatpush1.msra.mxu0 0.0
    %105 = vmatprep.subr.mxu0 0.0
    %106 = vmatpush1.msra.mxu0 0.0
    %107 = vmatprep.subr.mxu0 0.0
    %108 = vmatpush1.msra.mxu0 0.0
    %109 = vmatprep.subr.mxu0 0.0
    %110 = vmatpush1.msra.mxu0 0.0
    %111 = vmatprep.subr.mxu0 0.0
    %112 = vmatpush1.msra.mxu0 0.0
    %113 = vmatprep.subr.mxu0 0.0
    %114 = vmatpush1.msra.mxu0 0.0
    %115 = vmatprep.subr.mxu0 0.0
    %116 = vmatpush1.msra.mxu0 0.0
    %117 = vmatprep.subr.mxu0 0.0
    %118 = vmatpush1.msra.mxu0 0.0
    %119 = vmatprep.subr.mxu0 0.0
    %120 = vmatpush1.msra.mxu0 0.0
    %121 = vmatprep.subr.mxu0 0.0
    %122 = vmatpush1.msra.mxu0 0.0
    %123 = vmatprep.subr.mxu0 0.0
    %124 = vmatpush1.msra.mxu0 0.0
    %125 = vmatprep.subr.mxu0 0.0
    %126 = vmatpush1.msra.mxu0 0.0
    %127 = vmatprep.subr.mxu0 0.0
    %128 = vmatpush1.msra.mxu0 0.0
    %129 = vmatprep.subr.mxu0 0.0
    %130 = vmatpush1.msra.mxu0 0.0
    %131 = vmatprep.subr.mxu0 0.0
    %132 = vmatpush1.msra.mxu0 0.0
    %133 = vmatprep.mubr.f32.mxu0 0.0
    %134 = vmatmul.mubr.f32.gmra.mrb[0].mxu0 %v64
    %v135 = vpop.f32.mrb[0].mxu0
    %v136 = vadd.f32 0.0, %v135
    %v137 = vpop.f32.mrb[0].mxu0
    %138 = vmatprep.mubr.f32.mxu0 0.0
    %139 = vmatmul.mubr.f32.gmra.mrb[0].mxu0 %v67
    %v140 = vpop.f32.mrb[0].mxu0
    %v141 = vadd.f32 0.0, %v140
    %v142 = vpop.f32.mrb[0].mxu0
    %143 = vdwg.mxu0
    %v144 = vld [vmem:[#allocation7 + $0x100] sm:$0x1]
    %v145 = vlaneseq
    %v146 = vshrl.u32 %v145, 7
    %v147 = vsub.s32 0, %v146
    %v148 = vrot.slane %v144, %v147
    %v150 = vsel %vm62, %v56, 0
    %v153 = vsel %vm62, %v57, 0
    %155 = vmatprep.subr.mxu0 0.0
    %156 = vmatpush1.msra.mxu0 %v136
    %157 = vmatprep.subr.mxu0 0.0
    %158 = vmatpush1.msra.mxu0 %v141
    %159 = vmatprep.subr.mxu0 0.0
    %160 = vmatpush1.msra.mxu0 0.0
    %161 = vmatprep.subr.mxu0 0.0
    %162 = vmatpush1.msra.mxu0 0.0
    %163 = vmatprep.subr.mxu0 0.0
    %164 = vmatpush1.msra.mxu0 0.0
    %165 = vmatprep.subr.mxu0 0.0
    %166 = vmatpush1.msra.mxu0 0.0
    %167 = vmatprep.subr.mxu0 0.0
    %168 = vmatpush1.msra.mxu0 0.0
    %169 = vmatprep.subr.mxu0 0.0
    %170 = vmatpush1.msra.mxu0 0.0
    %171 = vmatprep.subr.mxu0 0.0
    %172 = vmatpush1.msra.mxu0 0.0
    %173 = vmatprep.subr.mxu0 0.0
    %174 = vmatpush1.msra.mxu0 0.0
    %175 = vmatprep.subr.mxu0 0.0
    %176 = vmatpush1.msra.mxu0 0.0
    %177 = vmatprep.subr.mxu0 0.0
    %178 = vmatpush1.msra.mxu0 0.0
    %179 = vmatprep.subr.mxu0 0.0
    %180 = vmatpush1.msra.mxu0 0.0
    %181 = vmatprep.subr.mxu0 0.0
    %182 = vmatpush1.msra.mxu0 0.0
    %183 = vmatprep.subr.mxu0 0.0
    %184 = vmatpush1.msra.mxu0 0.0
    %185 = vmatprep.subr.mxu0 0.0
    %186 = vmatpush1.msra.mxu0 0.0
    %187 = vmatprep.subr.mxu0 0.0
    %188 = vmatpush1.msra.mxu0 0.0
    %189 = vmatprep.subr.mxu0 0.0
    %190 = vmatpush1.msra.mxu0 0.0
    %191 = vmatprep.subr.mxu0 0.0
    %192 = vmatpush1.msra.mxu0 0.0
    %193 = vmatprep.subr.mxu0 0.0
    %194 = vmatpush1.msra.mxu0 0.0
    %195 = vmatprep.subr.mxu0 0.0
    %196 = vmatpush1.msra.mxu0 0.0
    %197 = vmatprep.subr.mxu0 0.0
    %198 = vmatpush1.msra.mxu0 0.0
    %199 = vmatprep.subr.mxu0 0.0
    %200 = vmatpush1.msra.mxu0 0.0
    %201 = vmatprep.subr.mxu0 0.0
    %202 = vmatpush1.msra.mxu0 0.0
    %203 = vmatprep.subr.mxu0 0.0
    %204 = vmatpush1.msra.mxu0 0.0
    %205 = vmatprep.subr.mxu0 0.0
    %206 = vmatpush1.msra.mxu0 0.0
    %207 = vmatprep.subr.mxu0 0.0
    %208 = vmatpush1.msra.mxu0 0.0
    %209 = vmatprep.subr.mxu0 0.0
    %210 = vmatpush1.msra.mxu0 0.0
    %211 = vmatprep.subr.mxu0 0.0
    %212 = vmatpush1.msra.mxu0 0.0
    %213 = vmatprep.subr.mxu0 0.0
    %214 = vmatpush1.msra.mxu0 0.0
    %215 = vmatprep.subr.mxu0 0.0
    %216 = vmatpush1.msra.mxu0 0.0
    %217 = vmatprep.subr.mxu0 0.0
    %218 = vmatpush1.msra.mxu0 0.0
    %219 = vmatprep.mubr.f32.mxu0 0.0
    %220 = vmatmul.mubr.f32.gmra.mrb[0].mxu0 %v150
    %v221 = vpop.f32.mrb[0].mxu0
    %v222 = vadd.f32 %v148, %v221
    %v223 = vpop.f32.mrb[0].mxu0
    %224 = vmatprep.mubr.f32.mxu0 0.0
    %225 = vmatmul.mubr.f32.gmra.mrb[0].mxu0 %v153
    %v226 = vpop.f32.mrb[0].mxu0
    %v227 = vadd.f32 %v148, %v226
    %v228 = vpop.f32.mrb[0].mxu0
    %229 = vdwg.mxu0
    %v230 = vmax.f32 %v222, 0.0
    %v231 = vmax.f32 %v227, 0.0
    %v232 = vld [vmem:[#allocation7 + $0x10] sm:$0xff]
    %v233 = vld [vmem:[#allocation7 + $0x18] sm:$0xff]
    %v234 = vld [vmem:[#allocation7 + $0x20] sm:$0xff]
    %v235 = vld [vmem:[#allocation7 + $0x28] sm:$0xff]
    %v236 = vld [vmem:[#allocation7 + $0x30] sm:$0xff]
    %v237 = vld [vmem:[#allocation7 + $0x38] sm:$0xff]
    %v238 = vld [vmem:[#allocation7 + $0x40] sm:$0xff]
    %v239 = vld [vmem:[#allocation7 + $0x48] sm:$0xff]
    %vm240 = vcmask 523264
    %v242 = vsel %vm240, %v230, 0
    %v245 = vsel %vm240, %v231, 0
    %247 = vmatprep.subr.mxu0 0.0
    %248 = vmatpush1.msra.mxu0 %v232
    %249 = vmatprep.subr.mxu0 0.0
    %250 = vmatpush1.msra.mxu0 %v233
    %251 = vmatprep.subr.mxu0 0.0
    %252 = vmatpush1.msra.mxu0 %v234
    %253 = vmatprep.subr.mxu0 0.0
    %254 = vmatpush1.msra.mxu0 %v235
    %255 = vmatprep.subr.mxu0 0.0
    %256 = vmatpush1.msra.mxu0 %v236
    %257 = vmatprep.subr.mxu0 0.0
    %258 = vmatpush1.msra.mxu0 %v237
    %259 = vmatprep.subr.mxu0 0.0
    %260 = vmatpush1.msra.mxu0 %v238
    %261 = vmatprep.subr.mxu0 0.0
    %262 = vmatpush1.msra.mxu0 %v239
    %263 = vmatprep.subr.mxu0 0.0
    %264 = vmatpush1.msra.mxu0 0.0
    %265 = vmatprep.subr.mxu0 0.0
    %266 = vmatpush1.msra.mxu0 0.0
    %267 = vmatprep.subr.mxu0 0.0
    %268 = vmatpush1.msra.mxu0 0.0
    %269 = vmatprep.subr.mxu0 0.0
    %270 = vmatpush1.msra.mxu0 0.0
    %271 = vmatprep.subr.mxu0 0.0
    %272 = vmatpush1.msra.mxu0 0.0
    %273 = vmatprep.subr.mxu0 0.0
    %274 = vmatpush1.msra.mxu0 0.0
    %275 = vmatprep.subr.mxu0 0.0
    %276 = vmatpush1.msra.mxu0 0.0
    %277 = vmatprep.subr.mxu0 0.0
    %278 = vmatpush1.msra.mxu0 0.0
    %279 = vmatprep.subr.mxu0 0.0
    %280 = vmatpush1.msra.mxu0 0.0
    %281 = vmatprep.subr.mxu0 0.0
    %282 = vmatpush1.msra.mxu0 0.0
    %283 = vmatprep.subr.mxu0 0.0
    %284 = vmatpush1.msra.mxu0 0.0
    %285 = vmatprep.subr.mxu0 0.0
    %286 = vmatpush1.msra.mxu0 0.0
    %287 = vmatprep.subr.mxu0 0.0
    %288 = vmatpush1.msra.mxu0 0.0
    %289 = vmatprep.subr.mxu0 0.0
    %290 = vmatpush1.msra.mxu0 0.0
    %291 = vmatprep.subr.mxu0 0.0
    %292 = vmatpush1.msra.mxu0 0.0
    %293 = vmatprep.subr.mxu0 0.0
    %294 = vmatpush1.msra.mxu0 0.0
    %295 = vmatprep.subr.mxu0 0.0
    %296 = vmatpush1.msra.mxu0 0.0
    %297 = vmatprep.subr.mxu0 0.0
    %298 = vmatpush1.msra.mxu0 0.0
    %299 = vmatprep.subr.mxu0 0.0
    %300 = vmatpush1.msra.mxu0 0.0
    %301 = vmatprep.subr.mxu0 0.0
    %302 = vmatpush1.msra.mxu0 0.0
    %303 = vmatprep.subr.mxu0 0.0
    %304 = vmatpush1.msra.mxu0 0.0
    %305 = vmatprep.subr.mxu0 0.0
    %306 = vmatpush1.msra.mxu0 0.0
    %307 = vmatprep.subr.mxu0 0.0
    %308 = vmatpush1.msra.mxu0 0.0
    %309 = vmatprep.subr.mxu0 0.0
    %310 = vmatpush1.msra.mxu0 0.0
    %311 = vmatprep.mubr.f32.mxu0 0.0
    %312 = vmatmul.mubr.f32.gmra.mrb[0].mxu0 %v242
    %v313 = vpop.f32.mrb[0].mxu0
    %v314 = vadd.f32 0.0, %v313
    %v315 = vpop.f32.mrb[0].mxu0
    %316 = vmatprep.mubr.f32.mxu0 0.0
    %317 = vmatmul.mubr.f32.gmra.mrb[0].mxu0 %v245
    %v318 = vpop.f32.mrb[0].mxu0
    %v319 = vadd.f32 0.0, %v318
    %v320 = vpop.f32.mrb[0].mxu0
    %321 = vdwg.mxu0
    %v322 = vld [vmem:[#allocation7 + $0x108] sm:$0x1]
    %v323 = vlaneseq
    %v324 = vshrl.u32 %v323, 7
    %v325 = vsub.s32 0, %v324
    %v326 = vrot.slane %v322, %v325
    %327 = vmatprep.subr.mxu0 0.0
    %328 = vmatpush1.msra.mxu0 %v314
    %329 = vmatprep.subr.mxu0 0.0
    %330 = vmatpush1.msra.mxu0 %v319
    %331 = vmatprep.subr.mxu0 0.0
    %332 = vmatpush1.msra.mxu0 0.0
    %333 = vmatprep.subr.mxu0 0.0
    %334 = vmatpush1.msra.mxu0 0.0
    %335 = vmatprep.subr.mxu0 0.0
    %336 = vmatpush1.msra.mxu0 0.0
    %337 = vmatprep.subr.mxu0 0.0
    %338 = vmatpush1.msra.mxu0 0.0
    %339 = vmatprep.subr.mxu0 0.0
    %340 = vmatpush1.msra.mxu0 0.0
    %341 = vmatprep.subr.mxu0 0.0
    %342 = vmatpush1.msra.mxu0 0.0
    %343 = vmatprep.subr.mxu0 0.0
    %344 = vmatpush1.msra.mxu0 0.0
    %345 = vmatprep.subr.mxu0 0.0
    %346 = vmatpush1.msra.mxu0 0.0
    %347 = vmatprep.subr.mxu0 0.0
    %348 = vmatpush1.msra.mxu0 0.0
    %349 = vmatprep.subr.mxu0 0.0
    %350 = vmatpush1.msra.mxu0 0.0
    %351 = vmatprep.subr.mxu0 0.0
    %352 = vmatpush1.msra.mxu0 0.0
    %353 = vmatprep.subr.mxu0 0.0
    %354 = vmatpush1.msra.mxu0 0.0
    %355 = vmatprep.subr.mxu0 0.0
    %356 = vmatpush1.msra.mxu0 0.0
    %357 = vmatprep.subr.mxu0 0.0
    %358 = vmatpush1.msra.mxu0 0.0
    %359 = vmatprep.subr.mxu0 0.0
    %360 = vmatpush1.msra.mxu0 0.0
    %361 = vmatprep.subr.mxu0 0.0
    %362 = vmatpush1.msra.mxu0 0.0
    %363 = vmatprep.subr.mxu0 0.0
    %364 = vmatpush1.msra.mxu0 0.0
    %365 = vmatprep.subr.mxu0 0.0
    %366 = vmatpush1.msra.mxu0 0.0
    %367 = vmatprep.subr.mxu0 0.0
    %368 = vmatpush1.msra.mxu0 0.0
    %369 = vmatprep.subr.mxu0 0.0
    %370 = vmatpush1.msra.mxu0 0.0
    %371 = vmatprep.subr.mxu0 0.0
    %372 = vmatpush1.msra.mxu0 0.0
    %373 = vmatprep.subr.mxu0 0.0
    %374 = vmatpush1.msra.mxu0 0.0
    %375 = vmatprep.subr.mxu0 0.0
    %376 = vmatpush1.msra.mxu0 0.0
    %377 = vmatprep.subr.mxu0 0.0
    %378 = vmatpush1.msra.mxu0 0.0
    %379 = vmatprep.subr.mxu0 0.0
    %380 = vmatpush1.msra.mxu0 0.0
    %381 = vmatprep.subr.mxu0 0.0
    %382 = vmatpush1.msra.mxu0 0.0
    %383 = vmatprep.subr.mxu0 0.0
    %384 = vmatpush1.msra.mxu0 0.0
    %385 = vmatprep.subr.mxu0 0.0
    %386 = vmatpush1.msra.mxu0 0.0
    %387 = vmatprep.subr.mxu0 0.0
    %388 = vmatpush1.msra.mxu0 0.0
    %389 = vmatprep.subr.mxu0 0.0
    %390 = vmatpush1.msra.mxu0 0.0
    %391 = vmatprep.mubr.f32.mxu0 0.0
    %392 = vmatmul.mubr.f32.gmra.mrb[0].mxu0 %v150
    %v393 = vpop.f32.mrb[0].mxu0
    %v394 = vadd.f32 %v326, %v393
    %v395 = vpop.f32.mrb[0].mxu0
    %396 = vmatprep.mubr.f32.mxu0 0.0
    %397 = vmatmul.mubr.f32.gmra.mrb[0].mxu0 %v153
    %v398 = vpop.f32.mrb[0].mxu0
    %v399 = vadd.f32 %v326, %v398
    %v400 = vpop.f32.mrb[0].mxu0
    %401 = vdwg.mxu0
    %v402 = vmax.f32 %v394, 0.0
    %v403 = vmax.f32 %v399, 0.0
    %v404 = vld [vmem:[#allocation7 + $0x50] sm:$0xff]
    %v405 = vld [vmem:[#allocation7 + $0x58] sm:$0xff]
    %v406 = vld [vmem:[#allocation7 + $0x60] sm:$0xff]
    %v407 = vld [vmem:[#allocation7 + $0x68] sm:$0xff]
    %v408 = vld [vmem:[#allocation7 + $0x70] sm:$0xff]
    %v409 = vld [vmem:[#allocation7 + $0x78] sm:$0xff]
    %v410 = vld [vmem:[#allocation7 + $0x80] sm:$0xff]
    %v411 = vld [vmem:[#allocation7 + $0x88] sm:$0xff]
    %v412 = vld [vmem:[#allocation7 + $0x90] sm:$0xff]
    %v413 = vld [vmem:[#allocation7 + $0x98] sm:$0xff]
    %v414 = vld [vmem:[#allocation7 + $0xa0] sm:$0xff]
    %v415 = vld [vmem:[#allocation7 + $0xa8] sm:$0xff]
    %v416 = vld [vmem:[#allocation7 + $0xb0] sm:$0xff]
    %v417 = vld [vmem:[#allocation7 + $0xb8] sm:$0xff]
    %v418 = vld [vmem:[#allocation7 + $0xc0] sm:$0xff]
    %v419 = vld [vmem:[#allocation7 + $0xc8] sm:$0xff]
    %420 = vmatprep.subr.mxu0 0.0
    %421 = vmatpush1.msra.mxu0 %v404
    %422 = vmatprep.subr.mxu0 0.0
    %423 = vmatpush1.msra.mxu0 %v405
    %424 = vmatprep.subr.mxu0 0.0
    %425 = vmatpush1.msra.mxu0 %v406
    %426 = vmatprep.subr.mxu0 0.0
    %427 = vmatpush1.msra.mxu0 %v407
    %428 = vmatprep.subr.mxu0 0.0
    %429 = vmatpush1.msra.mxu0 %v408
    %430 = vmatprep.subr.mxu0 0.0
    %431 = vmatpush1.msra.mxu0 %v409
    %432 = vmatprep.subr.mxu0 0.0
    %433 = vmatpush1.msra.mxu0 %v410
    %434 = vmatprep.subr.mxu0 0.0
    %435 = vmatpush1.msra.mxu0 %v411
    %436 = vmatprep.subr.mxu0 0.0
    %437 = vmatpush1.msra.mxu0 %v412
    %438 = vmatprep.subr.mxu0 0.0
    %439 = vmatpush1.msra.mxu0 %v413
    %440 = vmatprep.subr.mxu0 0.0
    %441 = vmatpush1.msra.mxu0 %v414
    %442 = vmatprep.subr.mxu0 0.0
    %443 = vmatpush1.msra.mxu0 %v415
    %444 = vmatprep.subr.mxu0 0.0
    %445 = vmatpush1.msra.mxu0 %v416
    %446 = vmatprep.subr.mxu0 0.0
    %447 = vmatpush1.msra.mxu0 %v417
    %448 = vmatprep.subr.mxu0 0.0
    %449 = vmatpush1.msra.mxu0 %v418
    %450 = vmatprep.subr.mxu0 0.0
    %451 = vmatpush1.msra.mxu0 %v419
    %452 = vmatprep.subr.mxu0 0.0
    %453 = vmatpush1.msra.mxu0 0.0
    %454 = vmatprep.subr.mxu0 0.0
    %455 = vmatpush1.msra.mxu0 0.0
    %456 = vmatprep.subr.mxu0 0.0
    %457 = vmatpush1.msra.mxu0 0.0
    %458 = vmatprep.subr.mxu0 0.0
    %459 = vmatpush1.msra.mxu0 0.0
    %460 = vmatprep.subr.mxu0 0.0
    %461 = vmatpush1.msra.mxu0 0.0
    %462 = vmatprep.subr.mxu0 0.0
    %463 = vmatpush1.msra.mxu0 0.0
    %464 = vmatprep.subr.mxu0 0.0
    %465 = vmatpush1.msra.mxu0 0.0
    %466 = vmatprep.subr.mxu0 0.0
    %467 = vmatpush1.msra.mxu0 0.0
    %468 = vmatprep.subr.mxu0 0.0
    %469 = vmatpush1.msra.mxu0 0.0
    %470 = vmatprep.subr.mxu0 0.0
    %471 = vmatpush1.msra.mxu0 0.0
    %472 = vmatprep.subr.mxu0 0.0
    %473 = vmatpush1.msra.mxu0 0.0
    %474 = vmatprep.subr.mxu0 0.0
    %475 = vmatpush1.msra.mxu0 0.0
    %476 = vmatprep.subr.mxu0 0.0
    %477 = vmatpush1.msra.mxu0 0.0
    %478 = vmatprep.subr.mxu0 0.0
    %479 = vmatpush1.msra.mxu0 0.0
    %480 = vmatprep.subr.mxu0 0.0
    %481 = vmatpush1.msra.mxu0 0.0
    %482 = vmatprep.subr.mxu0 0.0
    %483 = vmatpush1.msra.mxu0 0.0
    %484 = vmatprep.mubr.f32.mxu0 0.0
    %485 = vmatmul.mubr.f32.gmra.mrb[0].mxu0 %v402
    %v486 = vpop.f32.mrb[0].mxu0
    %v487 = vadd.f32 0.0, %v486
    %v488 = vpop.f32.mrb[0].mxu0
    %489 = vmatprep.mubr.f32.mxu0 0.0
    %490 = vmatmul.mubr.f32.gmra.mrb[0].mxu0 %v403
    %v491 = vpop.f32.mrb[0].mxu0
    %v492 = vadd.f32 0.0, %v491
    %v493 = vpop.f32.mrb[0].mxu0
    %494 = vdwg.mxu0
    %v495 = vld [vmem:[#allocation7 + $0x110] sm:$0x1]
    %v496 = vlaneseq
    %v497 = vshrl.u32 %v496, 7
    %v498 = vsub.s32 0, %v497
    %v499 = vrot.slane %v495, %v498
    %500 = vmatprep.subr.mxu0 0.0
    %501 = vmatpush1.msra.mxu0 %v487
    %502 = vmatprep.subr.mxu0 0.0
    %503 = vmatpush1.msra.mxu0 %v492
    %504 = vmatprep.subr.mxu0 0.0
    %505 = vmatpush1.msra.mxu0 0.0
    %506 = vmatprep.subr.mxu0 0.0
    %507 = vmatpush1.msra.mxu0 0.0
    %508 = vmatprep.subr.mxu0 0.0
    %509 = vmatpush1.msra.mxu0 0.0
    %510 = vmatprep.subr.mxu0 0.0
    %511 = vmatpush1.msra.mxu0 0.0
    %512 = vmatprep.subr.mxu0 0.0
    %513 = vmatpush1.msra.mxu0 0.0
    %514 = vmatprep.subr.mxu0 0.0
    %515 = vmatpush1.msra.mxu0 0.0
    %516 = vmatprep.subr.mxu0 0.0
    %517 = vmatpush1.msra.mxu0 0.0
    %518 = vmatprep.subr.mxu0 0.0
    %519 = vmatpush1.msra.mxu0 0.0
    %520 = vmatprep.subr.mxu0 0.0
    %521 = vmatpush1.msra.mxu0 0.0
    %522 = vmatprep.subr.mxu0 0.0
    %523 = vmatpush1.msra.mxu0 0.0
    %524 = vmatprep.subr.mxu0 0.0
    %525 = vmatpush1.msra.mxu0 0.0
    %526 = vmatprep.subr.mxu0 0.0
    %527 = vmatpush1.msra.mxu0 0.0
    %528 = vmatprep.subr.mxu0 0.0
    %529 = vmatpush1.msra.mxu0 0.0
    %530 = vmatprep.subr.mxu0 0.0
    %531 = vmatpush1.msra.mxu0 0.0
    %532 = vmatprep.subr.mxu0 0.0
    %533 = vmatpush1.msra.mxu0 0.0
    %534 = vmatprep.subr.mxu0 0.0
    %535 = vmatpush1.msra.mxu0 0.0
    %536 = vmatprep.subr.mxu0 0.0
    %537 = vmatpush1.msra.mxu0 0.0
    %538 = vmatprep.subr.mxu0 0.0
    %539 = vmatpush1.msra.mxu0 0.0
    %540 = vmatprep.subr.mxu0 0.0
    %541 = vmatpush1.msra.mxu0 0.0
    %542 = vmatprep.subr.mxu0 0.0
    %543 = vmatpush1.msra.mxu0 0.0
    %544 = vmatprep.subr.mxu0 0.0
    %545 = vmatpush1.msra.mxu0 0.0
    %546 = vmatprep.subr.mxu0 0.0
    %547 = vmatpush1.msra.mxu0 0.0
    %548 = vmatprep.subr.mxu0 0.0
    %549 = vmatpush1.msra.mxu0 0.0
    %550 = vmatprep.subr.mxu0 0.0
    %551 = vmatpush1.msra.mxu0 0.0
    %552 = vmatprep.subr.mxu0 0.0
    %553 = vmatpush1.msra.mxu0 0.0
    %554 = vmatprep.subr.mxu0 0.0
    %555 = vmatpush1.msra.mxu0 0.0
    %556 = vmatprep.subr.mxu0 0.0
    %557 = vmatpush1.msra.mxu0 0.0
    %558 = vmatprep.subr.mxu0 0.0
    %559 = vmatpush1.msra.mxu0 0.0
    %560 = vmatprep.subr.mxu0 0.0
    %561 = vmatpush1.msra.mxu0 0.0
    %562 = vmatprep.subr.mxu0 0.0
    %563 = vmatpush1.msra.mxu0 0.0
    %564 = vmatprep.mubr.f32.mxu0 0.0
    %565 = vmatmul.mubr.f32.gmra.mrb[0].mxu0 %v150
    %v566 = vpop.f32.mrb[0].mxu0
    %v567 = vadd.f32 %v499, %v566
    %v568 = vpop.f32.mrb[0].mxu0
    %569 = vmatprep.mubr.f32.mxu0 0.0
    %570 = vmatmul.mubr.f32.gmra.mrb[0].mxu0 %v153
    %v571 = vpop.f32.mrb[0].mxu0
    %v572 = vadd.f32 %v499, %v571
    %v573 = vpop.f32.mrb[0].mxu0
    %574 = vdwg.mxu0
    %v575 = vmax.f32 %v567, 0.0
    %v576 = vmax.f32 %v572, 0.0
    %v577 = vld [vmem:[#allocation7 + $0xd0] sm:$0xff]
    %v578 = vld [vmem:[#allocation7 + $0xd8] sm:$0xff]
    %v579 = vmul.f32 %v575, %v577
    %v580 = vmul.f32 %v576, %v578
    %vm581 = vcmask 261120
    %v582 = vsel %vm581, %v579, 0.0
    %v583 = vsel %vm581, %v580, 0.0
    %v584 = vadd.f32 %v582, %v583
    %v585 = vrot.slane %v584, 4
    %v586 = vadd.f32 %v584, %v585
    %v587 = vrot.slane %v586, 2
    %v588 = vadd.f32 %v586, %v587
    %v589 = vrot.slane %v588, 1
    %v590 = vadd.f32 %v588, %v589
    %v591 = vld [vmem:[#allocation7 + $0xe0] sm:$0xff]
    %v592 = vld [vmem:[#allocation7 + $0xe8] sm:$0xff]
    %v593 = vld [vmem:[#allocation7 + $0xf0] sm:$0xff]
    %v594 = vld [vmem:[#allocation7 + $0xf8] sm:$0xff]
    %v595 = vld [vmem:[#allocation7 + $0x118] sm:$0x1]
    %597 = vset.pattern.permute.xlu0 0
    %598 = vperm.xlu0 %597, %v595
    %v599 = vpop.permute.xlu0 %598
    %v602 = vsel %vm581, %v590, 0
    %604 = vmatprep.subr.mxu0 0.0
    %605 = vmatpush1.msra.mxu0 %v591
    %606 = vmatprep.subr.mxu0 0.0
    %607 = vmatpush1.msra.mxu0 %v592
    %608 = vmatprep.subr.mxu0 0.0
    %609 = vmatpush1.msra.mxu0 %v593
    %610 = vmatprep.subr.mxu0 0.0
    %611 = vmatpush1.msra.mxu0 %v594
    %612 = vmatprep.subr.mxu0 0.0
    %613 = vmatpush1.msra.mxu0 0.0
    %614 = vmatprep.subr.mxu0 0.0
    %615 = vmatpush1.msra.mxu0 0.0
    %616 = vmatprep.subr.mxu0 0.0
    %617 = vmatpush1.msra.mxu0 0.0
    %618 = vmatprep.subr.mxu0 0.0
    %619 = vmatpush1.msra.mxu0 0.0
    %620 = vmatprep.subr.mxu0 0.0
    %621 = vmatpush1.msra.mxu0 0.0
    %622 = vmatprep.subr.mxu0 0.0
    %623 = vmatpush1.msra.mxu0 0.0
    %624 = vmatprep.subr.mxu0 0.0
    %625 = vmatpush1.msra.mxu0 0.0
    %626 = vmatprep.subr.mxu0 0.0
    %627 = vmatpush1.msra.mxu0 0.0
    %628 = vmatprep.subr.mxu0 0.0
    %629 = vmatpush1.msra.mxu0 0.0
    %630 = vmatprep.subr.mxu0 0.0
    %631 = vmatpush1.msra.mxu0 0.0
    %632 = vmatprep.subr.mxu0 0.0
    %633 = vmatpush1.msra.mxu0 0.0
    %634 = vmatprep.subr.mxu0 0.0
    %635 = vmatpush1.msra.mxu0 0.0
    %636 = vmatprep.subr.mxu0 0.0
    %637 = vmatpush1.msra.mxu0 0.0
    %638 = vmatprep.subr.mxu0 0.0
    %639 = vmatpush1.msra.mxu0 0.0
    %640 = vmatprep.subr.mxu0 0.0
    %641 = vmatpush1.msra.mxu0 0.0
    %642 = vmatprep.subr.mxu0 0.0
    %643 = vmatpush1.msra.mxu0 0.0
    %644 = vmatprep.subr.mxu0 0.0
    %645 = vmatpush1.msra.mxu0 0.0
    %646 = vmatprep.subr.mxu0 0.0
    %647 = vmatpush1.msra.mxu0 0.0
    %648 = vmatprep.subr.mxu0 0.0
    %649 = vmatpush1.msra.mxu0 0.0
    %650 = vmatprep.subr.mxu0 0.0
    %651 = vmatpush1.msra.mxu0 0.0
    %652 = vmatprep.subr.mxu0 0.0
    %653 = vmatpush1.msra.mxu0 0.0
    %654 = vmatprep.subr.mxu0 0.0
    %655 = vmatpush1.msra.mxu0 0.0
    %656 = vmatprep.subr.mxu0 0.0
    %657 = vmatpush1.msra.mxu0 0.0
    %658 = vmatprep.subr.mxu0 0.0
    %659 = vmatpush1.msra.mxu0 0.0
    %660 = vmatprep.subr.mxu0 0.0
    %661 = vmatpush1.msra.mxu0 0.0
    %662 = vmatprep.subr.mxu0 0.0
    %663 = vmatpush1.msra.mxu0 0.0
    %664 = vmatprep.subr.mxu0 0.0
    %665 = vmatpush1.msra.mxu0 0.0
    %666 = vmatprep.subr.mxu0 0.0
    %667 = vmatpush1.msra.mxu0 0.0
    %668 = vmatprep.mubr.f32.mxu0 0.0
    %669 = vmatmul.mubr.f32.gmra.mrb[0].mxu0 %v602
    %v670 = vpop.f32.mrb[0].mxu0
    %v671 = vadd.f32 %v599, %v670
    %v672 = vpop.f32.mrb[0].mxu0
    %673 = vdwg.mxu0
    %v674 = vsub.f32 0.0, %v671
    %v675 = vmul.f32 %v674, 1.442695
    %v676 = vpow.pop %v675
    %v677 = vadd.f32 %v676, 1.0
    %v678 = vrcp.pop %v677
    %vm679 = vcmask 8192
    %680 = vst.msk [vmem:[#allocation8] sm:$0x1] %vm679, %v678
    // Predicated region
    $region26: #{tpu_custom_call.1} parent=1 // pred_check
      _
    $region27: #{tpu_custom_call.1} parent=1 // pred_check_branch
      %682 = sbr.rel (0) target = $region29
    $region28: #{tpu_custom_call.1} parent=1 // pred_region
      %s684 = ssub.s32 16, 16
      %685 = vsyncadd [#allocation4], %s684
      %s687 = sshll.u32 [#allocation8], 4
      %s688 = int_to_ptr.vmem [resolvable:$true] %s687
      %690 = dma.vmem_to_hbm [thread:$0]  %s688, 16, %s3, [#allocation4]
    $region29: #{tpu_custom_call.1} parent=1 // pred_fallthru
      _
    // Predicated region
    $region30: #{tpu_custom_call.1} parent=1 // pred_check
      _
    $region31: #{tpu_custom_call.1} parent=1 // pred_check_branch
      %692 = sbr.rel (0) target = $region33
    $region32: #{tpu_custom_call.1} parent=1 // pred_region
      %693 = dma.done [#allocation4], 16
    $region33: #{tpu_custom_call.1} parent=1 // pred_fallthru
      _
    %694 = vsyncpa [#allocation3], 1
    %695 = vsyncpa [#allocation6], 1
    %696 = vsyncpa [#allocation4], 1

</llo_original>
